<compile_context>
chip_gen: v7x
topology: tpu7x:2x2x1
jax: 0.10.0
libtpu: 0.0.40
codegen_flags: <defaults>
</compile_context>

<pallas_src>
import jax
import jax.numpy as jnp
from jax.experimental import pallas as pl
from jax.experimental.pallas import tpu as pltpu


def _round_up(x, m):
    return ((x + m - 1) // m) * m


# Beyond this many states the one-hot gather becomes compute/VMEM bound;
# use the HBM row-gather fallback instead.
_MAX_FAST_NS = 2048


def _vmem_capacity_bytes():
    """Physical per-core VMEM (generation aware); conservative default."""
    try:
        cap = int(pltpu.get_tpu_info().vmem_capacity_bytes)
        if cap > 0:
            return cap
    except Exception:
        pass
    return 64 * 1024 * 1024  # v7x-sized conservative default


# ---------------------------------------------------------------------------
# Fast path: Q resident in VMEM, one-hot MXU gather, TB states per grid step.
# ---------------------------------------------------------------------------
def _onehot_gather_kernel(s_ref, q_ref, o_ref):
    # s_ref: (TB, 1) int32  -- state indices for this tile (already % n_s).
    # q_ref: (n_s, n_a)     -- full Q table, VMEM-resident across the grid.
    # o_ref: (TB, n_a)      -- sublane-dense output tile.
    tb = o_ref.shape[0]
    n_s = q_ref.shape[0]
    # onehot[j, k] = (s[j] == k); indices arrive as a (TB, 1) column so the
    # compare broadcasts along lanes -> canonical (M,K) LHS, no transpose.
    iota = jax.lax.broadcasted_iota(jnp.int32, (tb, n_s), 1)
    onehot = (iota == s_ref[...]).astype(q_ref.dtype)
    # out[j, :] = sum_k onehot[j, k] * q[k, :]  -> one MXU matmul per tile.
    # HIGHEST precision keeps the f32 gather exact (one-hot rows pick q rows).
    o_ref[...] = jnp.dot(
        onehot,
        q_ref[...],
        preferred_element_type=jnp.float32,
        precision=jax.lax.Precision.HIGHEST,
    ).astype(o_ref.dtype)
    # NOTE: for n_a << 128 a lane-dense transposed (n_a, TB) output layout
    # would be faster; n_a >= 128 tables are already lane-dense as written.


def _forward_vmem_resident(q_matrix, s_mod, tb, vmem_limit_bytes, q_single_buffered):
    n_s, n_a = q_matrix.shape
    batch = int(s_mod.shape[0])
    itemsize = q_matrix.dtype.itemsize

    num_tiles = pl.cdiv(batch, tb)
    padded = num_tiles * tb
    # Only the tiny index array is padded; the output keeps its exact shape
    # (Pallas masks the partial final output block) so no post-kernel slice.
    s_col = jnp.zeros((padded, 1), jnp.int32).at[:batch, 0].set(s_mod)

    q_spec_kwargs = {}
    if q_single_buffered:
        # Constant index_map -> the table never changes; a single buffer
        # halves its VMEM residency.
        q_spec_kwargs["pipeline_mode"] = pl.Buffered(1)
    q_spec = pl.BlockSpec((n_s, n_a), lambda i: (0, 0), **q_spec_kwargs)

    bytes_accessed = batch * n_a * itemsize + n_s * n_a * itemsize + padded * 4

    return pl.pallas_call(
        _onehot_gather_kernel,
        out_shape=jax.ShapeDtypeStruct((batch, n_a), q_matrix.dtype),
        grid_spec=pltpu.PrefetchScalarGridSpec(
            num_scalar_prefetch=0,
            grid=(num_tiles,),
            in_specs=[
                pl.BlockSpec((tb, 1), lambda i: (i, 0)),  # per-tile indices
                q_spec,                                   # Q resident in VMEM
            ],
            out_specs=pl.BlockSpec((tb, n_a), lambda i: (i, 0)),
        ),
        compiler_params=pltpu.CompilerParams(
            # Disjoint output tiles per step -> batch axis shardable across
            # the two TensorCores on v7x (harmless on v5e/v6e).
            dimension_semantics=("parallel",),
            vmem_limit_bytes=int(vmem_limit_bytes),
        ),
        cost_estimate=pl.CostEstimate(
            flops=int(2 * padded * n_s * n_a),
            transcendentals=0,
            bytes_accessed=int(bytes_accessed),
        ),
    )(s_col, q_matrix)


# ---------------------------------------------------------------------------
# Fallback path: Q stays in HBM; batched manual-DMA row gather, TB rows/step.
# ---------------------------------------------------------------------------
def _dma_gather_kernel(s_ref, q_hbm, o_ref, buf, sem):
    # s_ref: SMEM int32[num_tiles*TB]  (scalar-prefetched, already % n_s)
    # q_hbm: (n_s, n_a) in HBM (memory_space=pl.ANY)
    # o_ref: (TB, n_a) output tile
    # buf:   VMEM (2, TB, n_a) double buffer; sem: DMA sems (2, TB)
    tb = o_ref.shape[0]
    i = pl.program_id(0)
    n_tiles = pl.num_programs(0)

    def start_tile(tile, slot):
        @pl.loop(0, tb)
        def _(r):
            row = s_ref[tile * tb + r]
            pltpu.make_async_copy(
                q_hbm.at[row], buf.at[slot, r], sem.at[slot, r]
            ).start()

    @pl.when(i == 0)
    def _():
        start_tile(0, 0)

    # Prefetch the next tile's rows while we finish / write back this tile.
    @pl.when(i + 1 < n_tiles)
    def _():
        start_tile(i + 1, (i + 1) % 2)

    slot = i % 2

    @pl.loop(0, tb)
    def _(r):
        pltpu.make_async_copy(
            q_hbm.at[0], buf.at[slot, r], sem.at[slot, r]
        ).wait()

    # One large, sublane-dense writeback per tile.
    o_ref[...] = buf[slot]


def _forward_dma_gather(q_matrix, s_mod, tb):
    n_s, n_a = q_matrix.shape
    batch = int(s_mod.shape[0])
    itemsize = q_matrix.dtype.itemsize

    num_tiles = pl.cdiv(batch, tb)
    padded = num_tiles * tb
    s_pad = jnp.zeros((padded,), jnp.int32).at[:batch].set(s_mod)

    return pl.pallas_call(
        _dma_gather_kernel,
        out_shape=jax.ShapeDtypeStruct((batch, n_a), q_matrix.dtype),
        grid_spec=pltpu.PrefetchScalarGridSpec(
            num_scalar_prefetch=1,
            grid=(num_tiles,),
            in_specs=[pl.BlockSpec(memory_space=pl.ANY)],  # Q stays in HBM
            out_specs=pl.BlockSpec((tb, n_a), lambda i, s: (i, 0)),
            scratch_shapes=[
                pltpu.VMEM((2, tb, n_a), q_matrix.dtype),
                pltpu.SemaphoreType.DMA((2, tb)),
            ],
        ),
        compiler_params=pltpu.CompilerParams(
            dimension_semantics=("arbitrary",),
        ),
        cost_estimate=pl.CostEstimate(
            flops=0,
            transcendentals=0,
            bytes_accessed=int(2 * batch * n_a * itemsize + padded * 4),
        ),
    )(s_pad, q_matrix)


# ---------------------------------------------------------------------------
# Wrapper (path selection + tiling plan).
# ---------------------------------------------------------------------------
def _plan_fast_tile(batch, n_s, n_a, itemsize, budget, target_tile_bytes):
    """Rows per fast-path tile, or None if the fast path doesn't fit."""
    if n_s > _MAX_FAST_NS:
        return None
    padded8 = _round_up(max(batch, 1), 8)
    table_bytes = 2 * n_s * n_a * itemsize            # worst case dbl-buffered
    headroom = 4 * 1024 * 1024                        # Mosaic internal scratch
    # Per gathered row: dbl-buffered output + dbl-buffered index column +
    # one-hot / iota / compare intermediates.
    per_row = 2 * n_a * itemsize + 2 * 4 + 3 * n_s * 4
    avail = budget - table_bytes - headroom
    if avail < 8 * per_row:
        return None
    tb = max(8, _round_up(max(1, target_tile_bytes // max(1, n_a * itemsize)), 8))
    tb = min(tb, padded8, (avail // per_row) // 8 * 8)
    # Keep at least two tiles for large batches so the "parallel" axis can
    # occupy both TensorCores on v7x.
    if padded8 >= 1024 and 2 * tb > padded8:
        tb = max(8, _round_up(padded8 // 2, 8))
    return int(max(8, tb))


def q_tabular_forward(q_matrix, s, *, max_tile_rows=None, vmem_budget_bytes=None):
    """Pallas implementation of Q_Tabular.forward: Q[s % n_s, :].squeeze()."""
    q_matrix = jnp.asarray(q_matrix)
    n_s, n_a = q_matrix.shape
    s_flat = jnp.atleast_1d(jnp.asarray(s)).astype(jnp.int32).reshape(-1)
    batch = int(s_flat.shape[0])

    # torch.remainder (sign follows divisor) == jnp '%'; hoisted out of the
    # kernel so it runs once, vectorized, over the whole batch.
    s_mod = (s_flat % n_s).astype(jnp.int32)

    itemsize = q_matrix.dtype.itemsize
    cap = _vmem_capacity_bytes()
    budget = (
        int(vmem_budget_bytes)
        if vmem_budget_bytes is not None
        else max(16 * 1024 * 1024, int(cap * 0.6))
    )
    # v7x-class parts (smaller VMEM, much higher HBM BW) want bigger tiles.
    target_tile_bytes = (4 << 20) if cap <= (80 << 20) else (2 << 20)

    tb = _plan_fast_tile(batch, n_s, n_a, itemsize, budget, target_tile_bytes)
    if tb is not None and max_tile_rows is not None:
        tb = max(8, min(tb, _round_up(int(max_tile_rows), 8)))

    if tb is not None:
        vmem_limit = min(int(budget), int(cap))
        try:
            out = _forward_vmem_resident(q_matrix, s_mod, tb, vmem_limit, True)
        except Exception:
            # Older Pallas without pipeline_mode / Buffered(1) support on the
            # resident table: retry with default double-buffering.
            out = _forward_vmem_resident(q_matrix, s_mod, tb, vmem_limit, False)
    else:
        # Batched manual-DMA gather; keep the double buffer modest.
        tb_fb = max(8, min(512, ((1 << 20) // max(1, n_a * itemsize)) // 8 * 8))
        tb_fb = min(tb_fb, _round_up(max(batch, 1), 8))
        if max_tile_rows is not None:
            tb_fb = max(8, min(tb_fb, _round_up(int(max_tile_rows), 8)))
        out = _forward_dma_gather(q_matrix, s_mod, tb_fb)

    # torch's .squeeze(): drop all size-1 dims (scalar state -> (n_a,)).
    return jnp.squeeze(out)


if __name__ == "__main__":
    key = jax.random.PRNGKey(0)

    # Module config: n_s states, n_a actions (small, consistent with module).
    n_s, n_a = 16, 128
    k_q, k_s1, k_s2, k_s3 = jax.random.split(key, 4)

    # Deterministic synthetic "torch.normal" Q table.
    q_matrix = jax.random.normal(k_q, (n_s, n_a), dtype=jnp.float32)

    # 1) Batch with negative / out-of-range indices; remainder wraps.
    s = jax.random.randint(k_s1, (8,), minval=-n_s, maxval=3 * n_s, dtype=jnp.int32)
    out = jax.block_until_ready(q_tabular_forward(q_matrix, s))
    ref = jnp.squeeze(q_matrix[s % n_s, :])
    assert out.shape == ref.shape, (out.shape, ref.shape)
    assert jnp.allclose(out, ref), "mismatch vs reference gather (batched)"

    # 2) Non-multiple-of-tile batch with a forced small tile: exercises the
    #    multi-tile fast path and the masked partial final output block.
    s2 = jax.random.randint(k_s2, (11,), minval=0, maxval=5 * n_s, dtype=jnp.int32)
    out2 = jax.block_until_ready(q_tabular_forward(q_matrix, s2, max_tile_rows=8))
    ref2 = jnp.squeeze(q_matrix[s2 % n_s, :])
    assert out2.shape == ref2.shape, (out2.shape, ref2.shape)
    assert jnp.allclose(out2, ref2), "mismatch vs reference gather (partial tile)"

    # 3) Scalar state (torch: (n_a,) vector after squeeze).
    out_scalar = jax.block_until_ready(q_tabular_forward(q_matrix, 35))
    assert out_scalar.shape == (n_a,)
    assert jnp.allclose(out_scalar, q_matrix[35 % n_s, :])

    # 4) Force the HBM manual-DMA fallback path (as used for large tables).
    s3 = jax.random.randint(k_s3, (11,), minval=-2 * n_s, maxval=4 * n_s, dtype=jnp.int32)
    out3 = jax.block_until_ready(
        q_tabular_forward(q_matrix, s3, max_tile_rows=8, vmem_budget_bytes=0)
    )
    ref3 = jnp.squeeze(q_matrix[s3 % n_s, :])
    assert out3.shape == ref3.shape, (out3.shape, ref3.shape)
    assert jnp.allclose(out3, ref3), "mismatch vs reference gather (DMA fallback)"

    print("KERNEL_OK")
</pallas_src>

<mosaic_0001>
module attributes {stable_mosaic.version = 11 : i64} {
  func.func @_onehot_gather_kernel(%arg0: i32, %arg1: memref<8x1xi32, #tpu.memory_space<vmem>>, %arg2: memref<16x128xf32, #tpu.memory_space<vmem>>, %arg3: memref<8x128xf32, #tpu.memory_space<vmem>>) attributes {dimension_semantics = [#tpu.dimension_semantics<parallel>], iteration_bounds = array<i64: 1>, scalar_prefetch = 0 : i64, scratch_operands = 0 : i64, tpu.core_type = #tpu.core_type<tc>, window_params = [{transform_indices = @transform_0, window_bounds = array<i64: 8, 1>}, {pipeline_mode = #tpu.pipeline_mode<synchronous>, transform_indices = @transform_1, window_bounds = array<i64: 16, 128>}, {transform_indices = @transform_2, window_bounds = array<i64: 8, 128>}]} {
    %0 = tpu.iota {dimensions = array<i32: 1>} : vector<8x16xi32>
    %c0 = arith.constant 0 : index
    %c0_0 = arith.constant 0 : index
    %1 = vector.load %arg1[%c0, %c0_0] : memref<8x1xi32, #tpu.memory_space<vmem>>, vector<8x1xi32>
    %2 = vector.broadcast %1 : vector<8x1xi32> to vector<8x16xi32>
    %3 = arith.cmpi eq, %0, %2 : vector<8x16xi32>
    %4 = arith.extui %3 : vector<8x16xi1> to vector<8x16xi32>
    %5 = arith.sitofp %4 : vector<8x16xi32> to vector<8x16xf32>
    %c0_1 = arith.constant 0 : index
    %c0_2 = arith.constant 0 : index
    %6 = vector.load %arg2[%c0_1, %c0_2] : memref<16x128xf32, #tpu.memory_space<vmem>>, vector<16x128xf32>
    %cst = arith.constant dense<0.000000e+00> : vector<8x128xf32>
    %7 = tpu.matmul %5, %6, %cst {dimension_numbers = #tpu.dot_dimension_numbers<[1], [0], [0], [1], [0, 0, 1, 1], [], []>, precision = #tpu.contract_precision<fp32>} : vector<8x16xf32>, vector<16x128xf32>, vector<8x128xf32> -> vector<8x128xf32>
    %c0_3 = arith.constant 0 : index
    %c0_4 = arith.constant 0 : index
    %8 = vector.load %arg3[%c0_3, %c0_4] : memref<8x128xf32, #tpu.memory_space<vmem>>, vector<8x128xf32>
    tpu.vector_store %arg3[%c0_3, %c0_4], %7 {strides = array<i32>} : memref<8x128xf32, #tpu.memory_space<vmem>>, vector<8x128xf32>,
    return
  }
  func.func @transform_0(%arg0: i32) -> (i32, i32) {
    %c0_i32 = arith.constant 0 : i32
    %c0_i32_0 = arith.constant 0 : i32
    return %arg0, %c0_i32 : i32, i32
  }
  func.func @transform_1(%arg0: i32) -> (i32, i32) {
    %c0_i32 = arith.constant 0 : i32
    %c0_i32_0 = arith.constant 0 : i32
    %c0_i32_1 = arith.constant 0 : i32
    return %c0_i32, %c0_i32_0 : i32, i32
  }
  func.func @transform_2(%arg0: i32) -> (i32, i32) {
    %c0_i32 = arith.constant 0 : i32
    %c0_i32_0 = arith.constant 0 : i32
    return %arg0, %c0_i32 : i32, i32
  }
}

module attributes {stable_mosaic.version = 11 : i64} {
  func.func @_onehot_gather_kernel(%arg0: i32, %arg1: memref<8x1xi32, #tpu.memory_space<vmem>>, %arg2: memref<16x128xf32, #tpu.memory_space<vmem>>, %arg3: memref<8x128xf32, #tpu.memory_space<vmem>>) attributes {dimension_semantics = [#tpu.dimension_semantics<parallel>], iteration_bounds = array<i64: 1>, scalar_prefetch = 0 : i64, scratch_operands = 0 : i64, tpu.core_type = #tpu.core_type<tc>, window_params = [{transform_indices = @transform_0, window_bounds = array<i64: 8, 1>}, {pipeline_mode = #tpu.pipeline_mode<synchronous>, transform_indices = @transform_1, window_bounds = array<i64: 16, 128>}, {transform_indices = @transform_2, window_bounds = array<i64: 8, 128>}]} {
    %0 = tpu.iota {dimensions = array<i32: 1>} : vector<8x16xi32>
    %c0 = arith.constant 0 : index
    %c0_0 = arith.constant 0 : index
    %1 = vector.load %arg1[%c0, %c0_0] : memref<8x1xi32, #tpu.memory_space<vmem>>, vector<8x1xi32>
    %2 = vector.broadcast %1 : vector<8x1xi32> to vector<8x16xi32>
    %3 = arith.cmpi eq, %0, %2 : vector<8x16xi32>
    %4 = arith.extui %3 : vector<8x16xi1> to vector<8x16xi32>
    %5 = arith.sitofp %4 : vector<8x16xi32> to vector<8x16xf32>
    %c0_1 = arith.constant 0 : index
    %c0_2 = arith.constant 0 : index
    %6 = vector.load %arg2[%c0_1, %c0_2] : memref<16x128xf32, #tpu.memory_space<vmem>>, vector<16x128xf32>
    %cst = arith.constant dense<0.000000e+00> : vector<8x128xf32>
    %7 = tpu.matmul %5, %6, %cst {dimension_numbers = #tpu.dot_dimension_numbers<[1], [0], [0], [1], [0, 0, 1, 1], [], []>, precision = #tpu.contract_precision<fp32>} : vector<8x16xf32>, vector<16x128xf32>, vector<8x128xf32> -> vector<8x128xf32>
    %c0_3 = arith.constant 0 : index
    %c0_4 = arith.constant 0 : index
    %8 = vector.load %arg3[%c0_3, %c0_4] : memref<8x128xf32, #tpu.memory_space<vmem>>, vector<8x128xf32>
    tpu.vector_store %arg3[%c0_3, %c0_4], %7 {strides = array<i32>} : memref<8x128xf32, #tpu.memory_space<vmem>>, vector<8x128xf32>,
    return
  }
  func.func @transform_0(%arg0: i32) -> (i32, i32) {
    %c0_i32 = arith.constant 0 : i32
    %c0_i32_0 = arith.constant 0 : i32
    return %arg0, %c0_i32 : i32, i32
  }
  func.func @transform_1(%arg0: i32) -> (i32, i32) {
    %c0_i32 = arith.constant 0 : i32
    %c0_i32_0 = arith.constant 0 : i32
    %c0_i32_1 = arith.constant 0 : i32
    return %c0_i32, %c0_i32_0 : i32, i32
  }
  func.func @transform_2(%arg0: i32) -> (i32, i32) {
    %c0_i32 = arith.constant 0 : i32
    %c0_i32_0 = arith.constant 0 : i32
    return %arg0, %c0_i32 : i32, i32
  }
}

</mosaic_0001>

<llo_original>
// kernel: tpu_custom_call.1
$region0: #{tpu_custom_call.1}
  #allocation0 [shape = 'u32[]', space=smem, size = 0x4, offset = 0x4, fixed_abs, tag = 'smem constant byte address 0x4 - core index']
  #allocation1 [shape = 'u32[144,128]{1,0:T(1,128)}', space=vmem, size = 0x12000, scoped, tag = 'internal scratch']
  %s0 = inlined_call_operand.vmem [shape: s32[8,1], index: 0, kind: input, shape index: {}]
  %s1 = inlined_call_operand.hbm [shape: f32[16,128], index: 1, kind: input, shape index: {}]
  %s2 = inlined_call_operand.hbm [shape: f32[8,128], index: 2, kind: output, shape index: {}]
  %s3 = sld [smem:[#allocation0]]
  $region22: #{tpu_custom_call.1} parent=0
    _
  %s5 = ssub.s32 1, %s3
  %s6 = scalar_select 0, %s5, %s3
  $region1: #{tpu_custom_call.1} parent=0
    #allocation2 [shape = 'u8[8192]{0}', space=vmem, size = 0x2000, scoped, tag = 'input window, operand 1, single buffered']
    #allocation3 [shape = 's32[1]{0}', space=sflag, size = 0x4, scoped, tag = 'scoped memory for tpu_custom_call.1']
    #allocation4 [shape = 's32[1]{0}', space=sflag, size = 0x4, scoped, tag = 'scoped memory for tpu_custom_call.1']
    #allocation5 [shape = 'u8[4096]{0}', space=vmem, size = 0x1000, scoped, tag = 'output window, operand 0, single buffered']
    %7 = vsyncpa [#allocation3], 0
    %8 = vsyncpa [#allocation4], 0
    // Predicated region
    $region2: #{tpu_custom_call.1} parent=1 // pred_check
      _
    $region3: #{tpu_custom_call.1} parent=1 // pred_check_branch
      %10 = sbr.rel (0) target = $region5
    $region4: #{tpu_custom_call.1} parent=1 // pred_region
      _
    $region5: #{tpu_custom_call.1} parent=1 // pred_fallthru
      _
    // Predicated region
    $region6: #{tpu_custom_call.1} parent=1 // pred_check
      _
    $region7: #{tpu_custom_call.1} parent=1 // pred_check_branch
      %12 = sbr.rel (0) target = $region9
    $region8: #{tpu_custom_call.1} parent=1 // pred_region
      %s14 = ssub.s32 256, 256
      %15 = vsyncadd [#allocation3], %s14
      %s16 = sshll.u32 [#allocation2], 4
      %s17 = int_to_ptr.vmem [resolvable:$true] %s16
      %22 = dma.hbm_to_vmem [thread:$0]  %s1, 256, %s17, [#allocation3], 128, 128, 8
    $region9: #{tpu_custom_call.1} parent=1 // pred_fallthru
      _
    // Predicated region
    $region10: #{tpu_custom_call.1} parent=1 // pred_check
      _
    $region11: #{tpu_custom_call.1} parent=1 // pred_check_branch
      %24 = sbr.rel (0) target = $region13
    $region12: #{tpu_custom_call.1} parent=1 // pred_region
      %25 = dma.done [#allocation3], 256
    $region13: #{tpu_custom_call.1} parent=1 // pred_fallthru
      _
    %v26 = vlaneseq
    %v27 = vand.u32 %v26, 127
    %v28 = vld [vmem:[%s0] sm:$0xff]
    %29 = vset.pattern.permute.xlu0 0
    %30 = vperm.xlu0 %29, %v28
    %v31 = vpop.permute.xlu0 %30
    %vm32 = vcmp.eq.s32.totalorder %v27, %v31
    %v33 = vsel %vm32, 1, 0
    %v34 = vcvt.s32.f32 %v33
    %v35 = vld [vmem:[#allocation2] sm:$0xff]
    %v36 = vld [vmem:[#allocation2 + $0x8] sm:$0xff]
    %vm37 = vcmask 130048
    %v39 = vsel %vm37, %v34, 0
    %41 = vmatprep.subr.mxu0 0.0
    %v42 = vand.u32 %v35, 4294901760
    %43 = vmatpush1.msra.mxu0 %v42
    %44 = vmatprep.subr.mxu0 0.0
    %v45 = vand.u32 %v36, 4294901760
    %46 = vmatpush1.msra.mxu0 %v45
    %47 = vmatprep.subr.mxu0 0.0
    %48 = vmatpush1.msra.mxu0 0.0
    %49 = vmatprep.subr.mxu0 0.0
    %50 = vmatpush1.msra.mxu0 0.0
    %51 = vmatprep.subr.mxu0 0.0
    %52 = vmatpush1.msra.mxu0 0.0
    %53 = vmatprep.subr.mxu0 0.0
    %54 = vmatpush1.msra.mxu0 0.0
    %55 = vmatprep.subr.mxu0 0.0
    %56 = vmatpush1.msra.mxu0 0.0
    %57 = vmatprep.subr.mxu0 0.0
    %58 = vmatpush1.msra.mxu0 0.0
    %59 = vmatprep.subr.mxu0 0.0
    %60 = vmatpush1.msra.mxu0 0.0
    %61 = vmatprep.subr.mxu0 0.0
    %62 = vmatpush1.msra.mxu0 0.0
    %63 = vmatprep.subr.mxu0 0.0
    %64 = vmatpush1.msra.mxu0 0.0
    %65 = vmatprep.subr.mxu0 0.0
    %66 = vmatpush1.msra.mxu0 0.0
    %67 = vmatprep.subr.mxu0 0.0
    %68 = vmatpush1.msra.mxu0 0.0
    %69 = vmatprep.subr.mxu0 0.0
    %70 = vmatpush1.msra.mxu0 0.0
    %71 = vmatprep.subr.mxu0 0.0
    %72 = vmatpush1.msra.mxu0 0.0
    %73 = vmatprep.subr.mxu0 0.0
    %74 = vmatpush1.msra.mxu0 0.0
    %75 = vmatprep.subr.mxu0 0.0
    %76 = vmatpush1.msra.mxu0 0.0
    %77 = vmatprep.subr.mxu0 0.0
    %78 = vmatpush1.msra.mxu0 0.0
    %79 = vmatprep.subr.mxu0 0.0
    %80 = vmatpush1.msra.mxu0 0.0
    %81 = vmatprep.subr.mxu0 0.0
    %82 = vmatpush1.msra.mxu0 0.0
    %83 = vmatprep.subr.mxu0 0.0
    %84 = vmatpush1.msra.mxu0 0.0
    %85 = vmatprep.subr.mxu0 0.0
    %86 = vmatpush1.msra.mxu0 0.0
    %87 = vmatprep.subr.mxu0 0.0
    %88 = vmatpush1.msra.mxu0 0.0
    %89 = vmatprep.subr.mxu0 0.0
    %90 = vmatpush1.msra.mxu0 0.0
    %91 = vmatprep.subr.mxu0 0.0
    %92 = vmatpush1.msra.mxu0 0.0
    %93 = vmatprep.subr.mxu0 0.0
    %94 = vmatpush1.msra.mxu0 0.0
    %95 = vmatprep.subr.mxu0 0.0
    %96 = vmatpush1.msra.mxu0 0.0
    %97 = vmatprep.subr.mxu0 0.0
    %98 = vmatpush1.msra.mxu0 0.0
    %99 = vmatprep.subr.mxu0 0.0
    %100 = vmatpush1.msra.mxu0 0.0
    %101 = vmatprep.subr.mxu0 0.0
    %102 = vmatpush1.msra.mxu0 0.0
    %103 = vmatprep.subr.mxu0 0.0
    %104 = vmatpush1.msra.mxu0 0.0
    %105 = vmatprep.subr.mxu0 0.0
    %106 = vmatpush1.msra.mxu0 0.0
    %107 = vmatprep.mubr.f32.mxu0 0.0
    %v108 = vand.u32 %v39, 4294901760
    %v109 = vsub.f32 %v39, %v108
    %v110 = vand.u32 %v109, 4294901760
    %v111 = vsub.f32 %v109, %v110
    %v112 = vand.u32 %v111, 4294901760
    %113 = vmatmul.mubr.f32.gmra.mrb[0].mxu0 %v112
    %v114 = vpop.f32.mrb[0].mxu0
    %v115 = vadd.f32 0.0, %v114
    %v116 = vpop.f32.mrb[0].mxu0
    %117 = vdwg.mxu0
    %118 = vmatprep.subr.mxu0 0.0
    %v119 = vand.u32 %v35, 4294901760
    %v120 = vsub.f32 %v35, %v119
    %v121 = vand.u32 %v120, 4294901760
    %v122 = vsub.f32 %v120, %v121
    %v123 = vand.u32 %v122, 4294901760
    %124 = vmatpush1.msra.mxu0 %v123
    %125 = vmatprep.subr.mxu0 0.0
    %v126 = vand.u32 %v36, 4294901760
    %v127 = vsub.f32 %v36, %v126
    %v128 = vand.u32 %v127, 4294901760
    %v129 = vsub.f32 %v127, %v128
    %v130 = vand.u32 %v129, 4294901760
    %131 = vmatpush1.msra.mxu0 %v130
    %132 = vmatprep.subr.mxu0 0.0
    %133 = vmatpush1.msra.mxu0 0.0
    %134 = vmatprep.subr.mxu0 0.0
    %135 = vmatpush1.msra.mxu0 0.0
    %136 = vmatprep.subr.mxu0 0.0
    %137 = vmatpush1.msra.mxu0 0.0
    %138 = vmatprep.subr.mxu0 0.0
    %139 = vmatpush1.msra.mxu0 0.0
    %140 = vmatprep.subr.mxu0 0.0
    %141 = vmatpush1.msra.mxu0 0.0
    %142 = vmatprep.subr.mxu0 0.0
    %143 = vmatpush1.msra.mxu0 0.0
    %144 = vmatprep.subr.mxu0 0.0
    %145 = vmatpush1.msra.mxu0 0.0
    %146 = vmatprep.subr.mxu0 0.0
    %147 = vmatpush1.msra.mxu0 0.0
    %148 = vmatprep.subr.mxu0 0.0
    %149 = vmatpush1.msra.mxu0 0.0
    %150 = vmatprep.subr.mxu0 0.0
    %151 = vmatpush1.msra.mxu0 0.0
    %152 = vmatprep.subr.mxu0 0.0
    %153 = vmatpush1.msra.mxu0 0.0
    %154 = vmatprep.subr.mxu0 0.0
    %155 = vmatpush1.msra.mxu0 0.0
    %156 = vmatprep.subr.mxu0 0.0
    %157 = vmatpush1.msra.mxu0 0.0
    %158 = vmatprep.subr.mxu0 0.0
    %159 = vmatpush1.msra.mxu0 0.0
    %160 = vmatprep.subr.mxu0 0.0
    %161 = vmatpush1.msra.mxu0 0.0
    %162 = vmatprep.subr.mxu0 0.0
    %163 = vmatpush1.msra.mxu0 0.0
    %164 = vmatprep.subr.mxu0 0.0
    %165 = vmatpush1.msra.mxu0 0.0
    %166 = vmatprep.subr.mxu0 0.0
    %167 = vmatpush1.msra.mxu0 0.0
    %168 = vmatprep.subr.mxu0 0.0
    %169 = vmatpush1.msra.mxu0 0.0
    %170 = vmatprep.subr.mxu0 0.0
    %171 = vmatpush1.msra.mxu0 0.0
    %172 = vmatprep.subr.mxu0 0.0
    %173 = vmatpush1.msra.mxu0 0.0
    %174 = vmatprep.subr.mxu0 0.0
    %175 = vmatpush1.msra.mxu0 0.0
    %176 = vmatprep.subr.mxu0 0.0
    %177 = vmatpush1.msra.mxu0 0.0
    %178 = vmatprep.subr.mxu0 0.0
    %179 = vmatpush1.msra.mxu0 0.0
    %180 = vmatprep.subr.mxu0 0.0
    %181 = vmatpush1.msra.mxu0 0.0
    %182 = vmatprep.subr.mxu0 0.0
    %183 = vmatpush1.msra.mxu0 0.0
    %184 = vmatprep.subr.mxu0 0.0
    %185 = vmatpush1.msra.mxu0 0.0
    %186 = vmatprep.subr.mxu0 0.0
    %187 = vmatpush1.msra.mxu0 0.0
    %188 = vmatprep.subr.mxu0 0.0
    %189 = vmatpush1.msra.mxu0 0.0
    %190 = vmatprep.subr.mxu0 0.0
    %191 = vmatpush1.msra.mxu0 0.0
    %192 = vmatprep.mubr.f32.mxu0 0.0
    %v193 = vand.u32 %v39, 4294901760
    %194 = vmatmul.mubr.f32.gmra.mrb[0].mxu0 %v193
    %v195 = vpop.f32.mrb[0].mxu0
    %v196 = vadd.f32 %v115, %v195
    %v197 = vpop.f32.mrb[0].mxu0
    %198 = vdwg.mxu0
    %199 = vmatprep.subr.mxu0 0.0
    %v200 = vand.u32 %v35, 4294901760
    %v201 = vsub.f32 %v35, %v200
    %202 = vmatpush1.msra.mxu0 %v201
    %203 = vmatprep.subr.mxu0 0.0
    %v204 = vand.u32 %v36, 4294901760
    %v205 = vsub.f32 %v36, %v204
    %206 = vmatpush1.msra.mxu0 %v205
    %207 = vmatprep.subr.mxu0 0.0
    %208 = vmatpush1.msra.mxu0 0.0
    %209 = vmatprep.subr.mxu0 0.0
    %210 = vmatpush1.msra.mxu0 0.0
    %211 = vmatprep.subr.mxu0 0.0
    %212 = vmatpush1.msra.mxu0 0.0
    %213 = vmatprep.subr.mxu0 0.0
    %214 = vmatpush1.msra.mxu0 0.0
    %215 = vmatprep.subr.mxu0 0.0
    %216 = vmatpush1.msra.mxu0 0.0
    %217 = vmatprep.subr.mxu0 0.0
    %218 = vmatpush1.msra.mxu0 0.0
    %219 = vmatprep.subr.mxu0 0.0
    %220 = vmatpush1.msra.mxu0 0.0
    %221 = vmatprep.subr.mxu0 0.0
    %222 = vmatpush1.msra.mxu0 0.0
    %223 = vmatprep.subr.mxu0 0.0
    %224 = vmatpush1.msra.mxu0 0.0
    %225 = vmatprep.subr.mxu0 0.0
    %226 = vmatpush1.msra.mxu0 0.0
    %227 = vmatprep.subr.mxu0 0.0
    %228 = vmatpush1.msra.mxu0 0.0
    %229 = vmatprep.subr.mxu0 0.0
    %230 = vmatpush1.msra.mxu0 0.0
    %231 = vmatprep.subr.mxu0 0.0
    %232 = vmatpush1.msra.mxu0 0.0
    %233 = vmatprep.subr.mxu0 0.0
    %234 = vmatpush1.msra.mxu0 0.0
    %235 = vmatprep.subr.mxu0 0.0
    %236 = vmatpush1.msra.mxu0 0.0
    %237 = vmatprep.subr.mxu0 0.0
    %238 = vmatpush1.msra.mxu0 0.0
    %239 = vmatprep.subr.mxu0 0.0
    %240 = vmatpush1.msra.mxu0 0.0
    %241 = vmatprep.subr.mxu0 0.0
    %242 = vmatpush1.msra.mxu0 0.0
    %243 = vmatprep.subr.mxu0 0.0
    %244 = vmatpush1.msra.mxu0 0.0
    %245 = vmatprep.subr.mxu0 0.0
    %246 = vmatpush1.msra.mxu0 0.0
    %247 = vmatprep.subr.mxu0 0.0
    %248 = vmatpush1.msra.mxu0 0.0
    %249 = vmatprep.subr.mxu0 0.0
    %250 = vmatpush1.msra.mxu0 0.0
    %251 = vmatprep.subr.mxu0 0.0
    %252 = vmatpush1.msra.mxu0 0.0
    %253 = vmatprep.subr.mxu0 0.0
    %254 = vmatpush1.msra.mxu0 0.0
    %255 = vmatprep.subr.mxu0 0.0
    %256 = vmatpush1.msra.mxu0 0.0
    %257 = vmatprep.subr.mxu0 0.0
    %258 = vmatpush1.msra.mxu0 0.0
    %259 = vmatprep.subr.mxu0 0.0
    %260 = vmatpush1.msra.mxu0 0.0
    %261 = vmatprep.subr.mxu0 0.0
    %262 = vmatpush1.msra.mxu0 0.0
    %263 = vmatprep.subr.mxu0 0.0
    %264 = vmatpush1.msra.mxu0 0.0
    %265 = vmatprep.subr.mxu0 0.0
    %266 = vmatpush1.msra.mxu0 0.0
    %267 = vmatprep.mubr.f32.mxu0 0.0
    %v268 = vand.u32 %v39, 4294901760
    %v269 = vsub.f32 %v39, %v268
    %270 = vmatmul.mubr.f32.gmra.mrb[0].mxu0 %v269
    %v271 = vpop.f32.mrb[0].mxu0
    %v272 = vadd.f32 %v196, %v271
    %v273 = vpop.f32.mrb[0].mxu0
    %274 = vdwg.mxu0
    %275 = vmatprep.subr.mxu0 0.0
    %v276 = vand.u32 %v35, 4294901760
    %277 = vmatpush1.msra.mxu0 %v276
    %278 = vmatprep.subr.mxu0 0.0
    %v279 = vand.u32 %v36, 4294901760
    %280 = vmatpush1.msra.mxu0 %v279
    %281 = vmatprep.subr.mxu0 0.0
    %282 = vmatpush1.msra.mxu0 0.0
    %283 = vmatprep.subr.mxu0 0.0
    %284 = vmatpush1.msra.mxu0 0.0
    %285 = vmatprep.subr.mxu0 0.0
    %286 = vmatpush1.msra.mxu0 0.0
    %287 = vmatprep.subr.mxu0 0.0
    %288 = vmatpush1.msra.mxu0 0.0
    %289 = vmatprep.subr.mxu0 0.0
    %290 = vmatpush1.msra.mxu0 0.0
    %291 = vmatprep.subr.mxu0 0.0
    %292 = vmatpush1.msra.mxu0 0.0
    %293 = vmatprep.subr.mxu0 0.0
    %294 = vmatpush1.msra.mxu0 0.0
    %295 = vmatprep.subr.mxu0 0.0
    %296 = vmatpush1.msra.mxu0 0.0
    %297 = vmatprep.subr.mxu0 0.0
    %298 = vmatpush1.msra.mxu0 0.0
    %299 = vmatprep.subr.mxu0 0.0
    %300 = vmatpush1.msra.mxu0 0.0
    %301 = vmatprep.subr.mxu0 0.0
    %302 = vmatpush1.msra.mxu0 0.0
    %303 = vmatprep.subr.mxu0 0.0
    %304 = vmatpush1.msra.mxu0 0.0
    %305 = vmatprep.subr.mxu0 0.0
    %306 = vmatpush1.msra.mxu0 0.0
    %307 = vmatprep.subr.mxu0 0.0
    %308 = vmatpush1.msra.mxu0 0.0
    %309 = vmatprep.subr.mxu0 0.0
    %310 = vmatpush1.msra.mxu0 0.0
    %311 = vmatprep.subr.mxu0 0.0
    %312 = vmatpush1.msra.mxu0 0.0
    %313 = vmatprep.subr.mxu0 0.0
    %314 = vmatpush1.msra.mxu0 0.0
    %315 = vmatprep.subr.mxu0 0.0
    %316 = vmatpush1.msra.mxu0 0.0
    %317 = vmatprep.subr.mxu0 0.0
    %318 = vmatpush1.msra.mxu0 0.0
    %319 = vmatprep.subr.mxu0 0.0
    %320 = vmatpush1.msra.mxu0 0.0
    %321 = vmatprep.subr.mxu0 0.0
    %322 = vmatpush1.msra.mxu0 0.0
    %323 = vmatprep.subr.mxu0 0.0
    %324 = vmatpush1.msra.mxu0 0.0
    %325 = vmatprep.subr.mxu0 0.0
    %326 = vmatpush1.msra.mxu0 0.0
    %327 = vmatprep.subr.mxu0 0.0
    %328 = vmatpush1.msra.mxu0 0.0
    %329 = vmatprep.subr.mxu0 0.0
    %330 = vmatpush1.msra.mxu0 0.0
    %331 = vmatprep.subr.mxu0 0.0
    %332 = vmatpush1.msra.mxu0 0.0
    %333 = vmatprep.subr.mxu0 0.0
    %334 = vmatpush1.msra.mxu0 0.0
    %335 = vmatprep.subr.mxu0 0.0
    %336 = vmatpush1.msra.mxu0 0.0
    %337 = vmatprep.subr.mxu0 0.0
    %338 = vmatpush1.msra.mxu0 0.0
    %339 = vmatprep.subr.mxu0 0.0
    %340 = vmatpush1.msra.mxu0 0.0
    %341 = vmatprep.mubr.f32.mxu0 0.0
    %v342 = vand.u32 %v39, 4294901760
    %v343 = vsub.f32 %v39, %v342
    %v344 = vand.u32 %v343, 4294901760
    %345 = vmatmul.mubr.f32.gmra.mrb[0].mxu0 %v344
    %v346 = vpop.f32.mrb[0].mxu0
    %v347 = vadd.f32 %v272, %v346
    %v348 = vpop.f32.mrb[0].mxu0
    %349 = vdwg.mxu0
    %350 = vmatprep.subr.mxu0 0.0
    %v351 = vand.u32 %v35, 4294901760
    %v352 = vsub.f32 %v35, %v351
    %v353 = vand.u32 %v352, 4294901760
    %354 = vmatpush1.msra.mxu0 %v353
    %355 = vmatprep.subr.mxu0 0.0
    %v356 = vand.u32 %v36, 4294901760
    %v357 = vsub.f32 %v36, %v356
    %v358 = vand.u32 %v357, 4294901760
    %359 = vmatpush1.msra.mxu0 %v358
    %360 = vmatprep.subr.mxu0 0.0
    %361 = vmatpush1.msra.mxu0 0.0
    %362 = vmatprep.subr.mxu0 0.0
    %363 = vmatpush1.msra.mxu0 0.0
    %364 = vmatprep.subr.mxu0 0.0
    %365 = vmatpush1.msra.mxu0 0.0
    %366 = vmatprep.subr.mxu0 0.0
    %367 = vmatpush1.msra.mxu0 0.0
    %368 = vmatprep.subr.mxu0 0.0
    %369 = vmatpush1.msra.mxu0 0.0
    %370 = vmatprep.subr.mxu0 0.0
    %371 = vmatpush1.msra.mxu0 0.0
    %372 = vmatprep.subr.mxu0 0.0
    %373 = vmatpush1.msra.mxu0 0.0
    %374 = vmatprep.subr.mxu0 0.0
    %375 = vmatpush1.msra.mxu0 0.0
    %376 = vmatprep.subr.mxu0 0.0
    %377 = vmatpush1.msra.mxu0 0.0
    %378 = vmatprep.subr.mxu0 0.0
    %379 = vmatpush1.msra.mxu0 0.0
    %380 = vmatprep.subr.mxu0 0.0
    %381 = vmatpush1.msra.mxu0 0.0
    %382 = vmatprep.subr.mxu0 0.0
    %383 = vmatpush1.msra.mxu0 0.0
    %384 = vmatprep.subr.mxu0 0.0
    %385 = vmatpush1.msra.mxu0 0.0
    %386 = vmatprep.subr.mxu0 0.0
    %387 = vmatpush1.msra.mxu0 0.0
    %388 = vmatprep.subr.mxu0 0.0
    %389 = vmatpush1.msra.mxu0 0.0
    %390 = vmatprep.subr.mxu0 0.0
    %391 = vmatpush1.msra.mxu0 0.0
    %392 = vmatprep.subr.mxu0 0.0
    %393 = vmatpush1.msra.mxu0 0.0
    %394 = vmatprep.subr.mxu0 0.0
    %395 = vmatpush1.msra.mxu0 0.0
    %396 = vmatprep.subr.mxu0 0.0
    %397 = vmatpush1.msra.mxu0 0.0
    %398 = vmatprep.subr.mxu0 0.0
    %399 = vmatpush1.msra.mxu0 0.0
    %400 = vmatprep.subr.mxu0 0.0
    %401 = vmatpush1.msra.mxu0 0.0
    %402 = vmatprep.subr.mxu0 0.0
    %403 = vmatpush1.msra.mxu0 0.0
    %404 = vmatprep.subr.mxu0 0.0
    %405 = vmatpush1.msra.mxu0 0.0
    %406 = vmatprep.subr.mxu0 0.0
    %407 = vmatpush1.msra.mxu0 0.0
    %408 = vmatprep.subr.mxu0 0.0
    %409 = vmatpush1.msra.mxu0 0.0
    %410 = vmatprep.subr.mxu0 0.0
    %411 = vmatpush1.msra.mxu0 0.0
    %412 = vmatprep.subr.mxu0 0.0
    %413 = vmatpush1.msra.mxu0 0.0
    %414 = vmatprep.subr.mxu0 0.0
    %415 = vmatpush1.msra.mxu0 0.0
    %416 = vmatprep.subr.mxu0 0.0
    %417 = vmatpush1.msra.mxu0 0.0
    %418 = vmatprep.subr.mxu0 0.0
    %419 = vmatpush1.msra.mxu0 0.0
    %420 = vmatprep.mubr.f32.mxu0 0.0
    %v421 = vand.u32 %v39, 4294901760
    %422 = vmatmul.mubr.f32.gmra.mrb[0].mxu0 %v421
    %v423 = vpop.f32.mrb[0].mxu0
    %v424 = vadd.f32 %v347, %v423
    %v425 = vpop.f32.mrb[0].mxu0
    %426 = vdwg.mxu0
    %427 = vmatprep.subr.mxu0 0.0
    %v428 = vand.u32 %v35, 4294901760
    %429 = vmatpush1.msra.mxu0 %v428
    %430 = vmatprep.subr.mxu0 0.0
    %v431 = vand.u32 %v36, 4294901760
    %432 = vmatpush1.msra.mxu0 %v431
    %433 = vmatprep.subr.mxu0 0.0
    %434 = vmatpush1.msra.mxu0 0.0
    %435 = vmatprep.subr.mxu0 0.0
    %436 = vmatpush1.msra.mxu0 0.0
    %437 = vmatprep.subr.mxu0 0.0
    %438 = vmatpush1.msra.mxu0 0.0
    %439 = vmatprep.subr.mxu0 0.0
    %440 = vmatpush1.msra.mxu0 0.0
    %441 = vmatprep.subr.mxu0 0.0
    %442 = vmatpush1.msra.mxu0 0.0
    %443 = vmatprep.subr.mxu0 0.0
    %444 = vmatpush1.msra.mxu0 0.0
    %445 = vmatprep.subr.mxu0 0.0
    %446 = vmatpush1.msra.mxu0 0.0
    %447 = vmatprep.subr.mxu0 0.0
    %448 = vmatpush1.msra.mxu0 0.0
    %449 = vmatprep.subr.mxu0 0.0
    %450 = vmatpush1.msra.mxu0 0.0
    %451 = vmatprep.subr.mxu0 0.0
    %452 = vmatpush1.msra.mxu0 0.0
    %453 = vmatprep.subr.mxu0 0.0
    %454 = vmatpush1.msra.mxu0 0.0
    %455 = vmatprep.subr.mxu0 0.0
    %456 = vmatpush1.msra.mxu0 0.0
    %457 = vmatprep.subr.mxu0 0.0
    %458 = vmatpush1.msra.mxu0 0.0
    %459 = vmatprep.subr.mxu0 0.0
    %460 = vmatpush1.msra.mxu0 0.0
    %461 = vmatprep.subr.mxu0 0.0
    %462 = vmatpush1.msra.mxu0 0.0
    %463 = vmatprep.subr.mxu0 0.0
    %464 = vmatpush1.msra.mxu0 0.0
    %465 = vmatprep.subr.mxu0 0.0
    %466 = vmatpush1.msra.mxu0 0.0
    %467 = vmatprep.subr.mxu0 0.0
    %468 = vmatpush1.msra.mxu0 0.0
    %469 = vmatprep.subr.mxu0 0.0
    %470 = vmatpush1.msra.mxu0 0.0
    %471 = vmatprep.subr.mxu0 0.0
    %472 = vmatpush1.msra.mxu0 0.0
    %473 = vmatprep.subr.mxu0 0.0
    %474 = vmatpush1.msra.mxu0 0.0
    %475 = vmatprep.subr.mxu0 0.0
    %476 = vmatpush1.msra.mxu0 0.0
    %477 = vmatprep.subr.mxu0 0.0
    %478 = vmatpush1.msra.mxu0 0.0
    %479 = vmatprep.subr.mxu0 0.0
    %480 = vmatpush1.msra.mxu0 0.0
    %481 = vmatprep.subr.mxu0 0.0
    %482 = vmatpush1.msra.mxu0 0.0
    %483 = vmatprep.subr.mxu0 0.0
    %484 = vmatpush1.msra.mxu0 0.0
    %485 = vmatprep.subr.mxu0 0.0
    %486 = vmatpush1.msra.mxu0 0.0
    %487 = vmatprep.subr.mxu0 0.0
    %488 = vmatpush1.msra.mxu0 0.0
    %489 = vmatprep.subr.mxu0 0.0
    %490 = vmatpush1.msra.mxu0 0.0
    %491 = vmatprep.subr.mxu0 0.0
    %492 = vmatpush1.msra.mxu0 0.0
    %493 = vmatprep.mubr.f32.mxu0 0.0
    %v494 = vand.u32 %v39, 4294901760
    %495 = vmatmul.mubr.f32.gmra.mrb[0].mxu0 %v494
    %v496 = vpop.f32.mrb[0].mxu0
    %v497 = vadd.f32 %v424, %v496
    %v498 = vpop.f32.mrb[0].mxu0
    %499 = vdwg.mxu0
    %500 = vst [vmem:[#allocation5] sm:$0xff] %v497
    // Predicated region
    $region14: #{tpu_custom_call.1} parent=1 // pred_check
      _
    $region15: #{tpu_custom_call.1} parent=1 // pred_check_branch
      %502 = sbr.rel (0) target = $region17
    $region16: #{tpu_custom_call.1} parent=1 // pred_region
      %s504 = ssub.s32 128, 128
      %505 = vsyncadd [#allocation4], %s504
      %s507 = sshll.u32 [#allocation5], 4
      %s508 = int_to_ptr.vmem [resolvable:$true] %s507
      %510 = dma.vmem_to_hbm [thread:$0]  %s508, 128, %s2, [#allocation4]
    $region17: #{tpu_custom_call.1} parent=1 // pred_fallthru
      _
    // Predicated region
    $region18: #{tpu_custom_call.1} parent=1 // pred_check
      _
    $region19: #{tpu_custom_call.1} parent=1 // pred_check_branch
      %512 = sbr.rel (0) target = $region21
    $region20: #{tpu_custom_call.1} parent=1 // pred_region
      %513 = dma.done [#allocation4], 128
    $region21: #{tpu_custom_call.1} parent=1 // pred_fallthru
      _
    %514 = vsyncpa [#allocation3], 1
    %515 = vsyncpa [#allocation4], 1

// kernel: tpu_custom_call.1
$region0: #{tpu_custom_call.1}
  #allocation0 [shape = 'u32[]', space=smem, size = 0x4, offset = 0x4, fixed_abs, tag = 'smem constant byte address 0x4 - core index']
  #allocation1 [shape = 'u32[144,128]{1,0:T(1,128)}', space=vmem, size = 0x12000, scoped, tag = 'internal scratch']
  %s0 = inlined_call_operand.vmem [shape: s32[8,1], index: 0, kind: input, shape index: {}]
  %s1 = inlined_call_operand.hbm [shape: f32[16,128], index: 1, kind: input, shape index: {}]
  %s2 = inlined_call_operand.hbm [shape: f32[8,128], index: 2, kind: output, shape index: {}]
  %s3 = sld [smem:[#allocation0]]
  $region22: #{tpu_custom_call.1} parent=0
    _
  %s5 = ssub.s32 1, %s3
  %s6 = scalar_select 0, %s5, %s3
  $region1: #{tpu_custom_call.1} parent=0
    #allocation2 [shape = 'u8[8192]{0}', space=vmem, size = 0x2000, scoped, tag = 'input window, operand 1, single buffered']
    #allocation3 [shape = 's32[1]{0}', space=sflag, size = 0x4, scoped, tag = 'scoped memory for tpu_custom_call.1']
    #allocation4 [shape = 's32[1]{0}', space=sflag, size = 0x4, scoped, tag = 'scoped memory for tpu_custom_call.1']
    #allocation5 [shape = 'u8[4096]{0}', space=vmem, size = 0x1000, scoped, tag = 'output window, operand 0, single buffered']
    %7 = vsyncpa [#allocation3], 0
    %8 = vsyncpa [#allocation4], 0
    // Predicated region
    $region2: #{tpu_custom_call.1} parent=1 // pred_check
      _
    $region3: #{tpu_custom_call.1} parent=1 // pred_check_branch
      %10 = sbr.rel (0) target = $region5
    $region4: #{tpu_custom_call.1} parent=1 // pred_region
      _
    $region5: #{tpu_custom_call.1} parent=1 // pred_fallthru
      _
    // Predicated region
    $region6: #{tpu_custom_call.1} parent=1 // pred_check
      _
    $region7: #{tpu_custom_call.1} parent=1 // pred_check_branch
      %12 = sbr.rel (0) target = $region9
    $region8: #{tpu_custom_call.1} parent=1 // pred_region
      %s14 = ssub.s32 256, 256
      %15 = vsyncadd [#allocation3], %s14
      %s16 = sshll.u32 [#allocation2], 4
      %s17 = int_to_ptr.vmem [resolvable:$true] %s16
      %22 = dma.hbm_to_vmem [thread:$0]  %s1, 256, %s17, [#allocation3], 128, 128, 8
    $region9: #{tpu_custom_call.1} parent=1 // pred_fallthru
      _
    // Predicated region
    $region10: #{tpu_custom_call.1} parent=1 // pred_check
      _
    $region11: #{tpu_custom_call.1} parent=1 // pred_check_branch
      %24 = sbr.rel (0) target = $region13
    $region12: #{tpu_custom_call.1} parent=1 // pred_region
      %25 = dma.done [#allocation3], 256
    $region13: #{tpu_custom_call.1} parent=1 // pred_fallthru
      _
    %v26 = vlaneseq
    %v27 = vand.u32 %v26, 127
    %v28 = vld [vmem:[%s0] sm:$0xff]
    %29 = vset.pattern.permute.xlu0 0
    %30 = vperm.xlu0 %29, %v28
    %v31 = vpop.permute.xlu0 %30
    %vm32 = vcmp.eq.s32.totalorder %v27, %v31
    %v33 = vsel %vm32, 1, 0
    %v34 = vcvt.s32.f32 %v33
    %v35 = vld [vmem:[#allocation2] sm:$0xff]
    %v36 = vld [vmem:[#allocation2 + $0x8] sm:$0xff]
    %vm37 = vcmask 130048
    %v39 = vsel %vm37, %v34, 0
    %41 = vmatprep.subr.mxu0 0.0
    %v42 = vand.u32 %v35, 4294901760
    %43 = vmatpush1.msra.mxu0 %v42
    %44 = vmatprep.subr.mxu0 0.0
    %v45 = vand.u32 %v36, 4294901760
    %46 = vmatpush1.msra.mxu0 %v45
    %47 = vmatprep.subr.mxu0 0.0
    %48 = vmatpush1.msra.mxu0 0.0
    %49 = vmatprep.subr.mxu0 0.0
    %50 = vmatpush1.msra.mxu0 0.0
    %51 = vmatprep.subr.mxu0 0.0
    %52 = vmatpush1.msra.mxu0 0.0
    %53 = vmatprep.subr.mxu0 0.0
    %54 = vmatpush1.msra.mxu0 0.0
    %55 = vmatprep.subr.mxu0 0.0
    %56 = vmatpush1.msra.mxu0 0.0
    %57 = vmatprep.subr.mxu0 0.0
    %58 = vmatpush1.msra.mxu0 0.0
    %59 = vmatprep.subr.mxu0 0.0
    %60 = vmatpush1.msra.mxu0 0.0
    %61 = vmatprep.subr.mxu0 0.0
    %62 = vmatpush1.msra.mxu0 0.0
    %63 = vmatprep.subr.mxu0 0.0
    %64 = vmatpush1.msra.mxu0 0.0
    %65 = vmatprep.subr.mxu0 0.0
    %66 = vmatpush1.msra.mxu0 0.0
    %67 = vmatprep.subr.mxu0 0.0
    %68 = vmatpush1.msra.mxu0 0.0
    %69 = vmatprep.subr.mxu0 0.0
    %70 = vmatpush1.msra.mxu0 0.0
    %71 = vmatprep.subr.mxu0 0.0
    %72 = vmatpush1.msra.mxu0 0.0
    %73 = vmatprep.subr.mxu0 0.0
    %74 = vmatpush1.msra.mxu0 0.0
    %75 = vmatprep.subr.mxu0 0.0
    %76 = vmatpush1.msra.mxu0 0.0
    %77 = vmatprep.subr.mxu0 0.0
    %78 = vmatpush1.msra.mxu0 0.0
    %79 = vmatprep.subr.mxu0 0.0
    %80 = vmatpush1.msra.mxu0 0.0
    %81 = vmatprep.subr.mxu0 0.0
    %82 = vmatpush1.msra.mxu0 0.0
    %83 = vmatprep.subr.mxu0 0.0
    %84 = vmatpush1.msra.mxu0 0.0
    %85 = vmatprep.subr.mxu0 0.0
    %86 = vmatpush1.msra.mxu0 0.0
    %87 = vmatprep.subr.mxu0 0.0
    %88 = vmatpush1.msra.mxu0 0.0
    %89 = vmatprep.subr.mxu0 0.0
    %90 = vmatpush1.msra.mxu0 0.0
    %91 = vmatprep.subr.mxu0 0.0
    %92 = vmatpush1.msra.mxu0 0.0
    %93 = vmatprep.subr.mxu0 0.0
    %94 = vmatpush1.msra.mxu0 0.0
    %95 = vmatprep.subr.mxu0 0.0
    %96 = vmatpush1.msra.mxu0 0.0
    %97 = vmatprep.subr.mxu0 0.0
    %98 = vmatpush1.msra.mxu0 0.0
    %99 = vmatprep.subr.mxu0 0.0
    %100 = vmatpush1.msra.mxu0 0.0
    %101 = vmatprep.subr.mxu0 0.0
    %102 = vmatpush1.msra.mxu0 0.0
    %103 = vmatprep.subr.mxu0 0.0
    %104 = vmatpush1.msra.mxu0 0.0
    %105 = vmatprep.subr.mxu0 0.0
    %106 = vmatpush1.msra.mxu0 0.0
    %107 = vmatprep.mubr.f32.mxu0 0.0
    %v108 = vand.u32 %v39, 4294901760
    %v109 = vsub.f32 %v39, %v108
    %v110 = vand.u32 %v109, 4294901760
    %v111 = vsub.f32 %v109, %v110
    %v112 = vand.u32 %v111, 4294901760
    %113 = vmatmul.mubr.f32.gmra.mrb[0].mxu0 %v112
    %v114 = vpop.f32.mrb[0].mxu0
    %v115 = vadd.f32 0.0, %v114
    %v116 = vpop.f32.mrb[0].mxu0
    %117 = vdwg.mxu0
    %118 = vmatprep.subr.mxu0 0.0
    %v119 = vand.u32 %v35, 4294901760
    %v120 = vsub.f32 %v35, %v119
    %v121 = vand.u32 %v120, 4294901760
    %v122 = vsub.f32 %v120, %v121
    %v123 = vand.u32 %v122, 4294901760
    %124 = vmatpush1.msra.mxu0 %v123
    %125 = vmatprep.subr.mxu0 0.0
    %v126 = vand.u32 %v36, 4294901760
    %v127 = vsub.f32 %v36, %v126
    %v128 = vand.u32 %v127, 4294901760
    %v129 = vsub.f32 %v127, %v128
    %v130 = vand.u32 %v129, 4294901760
    %131 = vmatpush1.msra.mxu0 %v130
    %132 = vmatprep.subr.mxu0 0.0
    %133 = vmatpush1.msra.mxu0 0.0
    %134 = vmatprep.subr.mxu0 0.0
    %135 = vmatpush1.msra.mxu0 0.0
    %136 = vmatprep.subr.mxu0 0.0
    %137 = vmatpush1.msra.mxu0 0.0
    %138 = vmatprep.subr.mxu0 0.0
    %139 = vmatpush1.msra.mxu0 0.0
    %140 = vmatprep.subr.mxu0 0.0
    %141 = vmatpush1.msra.mxu0 0.0
    %142 = vmatprep.subr.mxu0 0.0
    %143 = vmatpush1.msra.mxu0 0.0
    %144 = vmatprep.subr.mxu0 0.0
    %145 = vmatpush1.msra.mxu0 0.0
    %146 = vmatprep.subr.mxu0 0.0
    %147 = vmatpush1.msra.mxu0 0.0
    %148 = vmatprep.subr.mxu0 0.0
    %149 = vmatpush1.msra.mxu0 0.0
    %150 = vmatprep.subr.mxu0 0.0
    %151 = vmatpush1.msra.mxu0 0.0
    %152 = vmatprep.subr.mxu0 0.0
    %153 = vmatpush1.msra.mxu0 0.0
    %154 = vmatprep.subr.mxu0 0.0
    %155 = vmatpush1.msra.mxu0 0.0
    %156 = vmatprep.subr.mxu0 0.0
    %157 = vmatpush1.msra.mxu0 0.0
    %158 = vmatprep.subr.mxu0 0.0
    %159 = vmatpush1.msra.mxu0 0.0
    %160 = vmatprep.subr.mxu0 0.0
    %161 = vmatpush1.msra.mxu0 0.0
    %162 = vmatprep.subr.mxu0 0.0
    %163 = vmatpush1.msra.mxu0 0.0
    %164 = vmatprep.subr.mxu0 0.0
    %165 = vmatpush1.msra.mxu0 0.0
    %166 = vmatprep.subr.mxu0 0.0
    %167 = vmatpush1.msra.mxu0 0.0
    %168 = vmatprep.subr.mxu0 0.0
    %169 = vmatpush1.msra.mxu0 0.0
    %170 = vmatprep.subr.mxu0 0.0
    %171 = vmatpush1.msra.mxu0 0.0
    %172 = vmatprep.subr.mxu0 0.0
    %173 = vmatpush1.msra.mxu0 0.0
    %174 = vmatprep.subr.mxu0 0.0
    %175 = vmatpush1.msra.mxu0 0.0
    %176 = vmatprep.subr.mxu0 0.0
    %177 = vmatpush1.msra.mxu0 0.0
    %178 = vmatprep.subr.mxu0 0.0
    %179 = vmatpush1.msra.mxu0 0.0
    %180 = vmatprep.subr.mxu0 0.0
    %181 = vmatpush1.msra.mxu0 0.0
    %182 = vmatprep.subr.mxu0 0.0
    %183 = vmatpush1.msra.mxu0 0.0
    %184 = vmatprep.subr.mxu0 0.0
    %185 = vmatpush1.msra.mxu0 0.0
    %186 = vmatprep.subr.mxu0 0.0
    %187 = vmatpush1.msra.mxu0 0.0
    %188 = vmatprep.subr.mxu0 0.0
    %189 = vmatpush1.msra.mxu0 0.0
    %190 = vmatprep.subr.mxu0 0.0
    %191 = vmatpush1.msra.mxu0 0.0
    %192 = vmatprep.mubr.f32.mxu0 0.0
    %v193 = vand.u32 %v39, 4294901760
    %194 = vmatmul.mubr.f32.gmra.mrb[0].mxu0 %v193
    %v195 = vpop.f32.mrb[0].mxu0
    %v196 = vadd.f32 %v115, %v195
    %v197 = vpop.f32.mrb[0].mxu0
    %198 = vdwg.mxu0
    %199 = vmatprep.subr.mxu0 0.0
    %v200 = vand.u32 %v35, 4294901760
    %v201 = vsub.f32 %v35, %v200
    %202 = vmatpush1.msra.mxu0 %v201
    %203 = vmatprep.subr.mxu0 0.0
    %v204 = vand.u32 %v36, 4294901760
    %v205 = vsub.f32 %v36, %v204
    %206 = vmatpush1.msra.mxu0 %v205
    %207 = vmatprep.subr.mxu0 0.0
    %208 = vmatpush1.msra.mxu0 0.0
    %209 = vmatprep.subr.mxu0 0.0
    %210 = vmatpush1.msra.mxu0 0.0
    %211 = vmatprep.subr.mxu0 0.0
    %212 = vmatpush1.msra.mxu0 0.0
    %213 = vmatprep.subr.mxu0 0.0
    %214 = vmatpush1.msra.mxu0 0.0
    %215 = vmatprep.subr.mxu0 0.0
    %216 = vmatpush1.msra.mxu0 0.0
    %217 = vmatprep.subr.mxu0 0.0
    %218 = vmatpush1.msra.mxu0 0.0
    %219 = vmatprep.subr.mxu0 0.0
    %220 = vmatpush1.msra.mxu0 0.0
    %221 = vmatprep.subr.mxu0 0.0
    %222 = vmatpush1.msra.mxu0 0.0
    %223 = vmatprep.subr.mxu0 0.0
    %224 = vmatpush1.msra.mxu0 0.0
    %225 = vmatprep.subr.mxu0 0.0
    %226 = vmatpush1.msra.mxu0 0.0
    %227 = vmatprep.subr.mxu0 0.0
    %228 = vmatpush1.msra.mxu0 0.0
    %229 = vmatprep.subr.mxu0 0.0
    %230 = vmatpush1.msra.mxu0 0.0
    %231 = vmatprep.subr.mxu0 0.0
    %232 = vmatpush1.msra.mxu0 0.0
    %233 = vmatprep.subr.mxu0 0.0
    %234 = vmatpush1.msra.mxu0 0.0
    %235 = vmatprep.subr.mxu0 0.0
    %236 = vmatpush1.msra.mxu0 0.0
    %237 = vmatprep.subr.mxu0 0.0
    %238 = vmatpush1.msra.mxu0 0.0
    %239 = vmatprep.subr.mxu0 0.0
    %240 = vmatpush1.msra.mxu0 0.0
    %241 = vmatprep.subr.mxu0 0.0
    %242 = vmatpush1.msra.mxu0 0.0
    %243 = vmatprep.subr.mxu0 0.0
    %244 = vmatpush1.msra.mxu0 0.0
    %245 = vmatprep.subr.mxu0 0.0
    %246 = vmatpush1.msra.mxu0 0.0
    %247 = vmatprep.subr.mxu0 0.0
    %248 = vmatpush1.msra.mxu0 0.0
    %249 = vmatprep.subr.mxu0 0.0
    %250 = vmatpush1.msra.mxu0 0.0
    %251 = vmatprep.subr.mxu0 0.0
    %252 = vmatpush1.msra.mxu0 0.0
    %253 = vmatprep.subr.mxu0 0.0
    %254 = vmatpush1.msra.mxu0 0.0
    %255 = vmatprep.subr.mxu0 0.0
    %256 = vmatpush1.msra.mxu0 0.0
    %257 = vmatprep.subr.mxu0 0.0
    %258 = vmatpush1.msra.mxu0 0.0
    %259 = vmatprep.subr.mxu0 0.0
    %260 = vmatpush1.msra.mxu0 0.0
    %261 = vmatprep.subr.mxu0 0.0
    %262 = vmatpush1.msra.mxu0 0.0
    %263 = vmatprep.subr.mxu0 0.0
    %264 = vmatpush1.msra.mxu0 0.0
    %265 = vmatprep.subr.mxu0 0.0
    %266 = vmatpush1.msra.mxu0 0.0
    %267 = vmatprep.mubr.f32.mxu0 0.0
    %v268 = vand.u32 %v39, 4294901760
    %v269 = vsub.f32 %v39, %v268
    %270 = vmatmul.mubr.f32.gmra.mrb[0].mxu0 %v269
    %v271 = vpop.f32.mrb[0].mxu0
    %v272 = vadd.f32 %v196, %v271
    %v273 = vpop.f32.mrb[0].mxu0
    %274 = vdwg.mxu0
    %275 = vmatprep.subr.mxu0 0.0
    %v276 = vand.u32 %v35, 4294901760
    %277 = vmatpush1.msra.mxu0 %v276
    %278 = vmatprep.subr.mxu0 0.0
    %v279 = vand.u32 %v36, 4294901760
    %280 = vmatpush1.msra.mxu0 %v279
    %281 = vmatprep.subr.mxu0 0.0
    %282 = vmatpush1.msra.mxu0 0.0
    %283 = vmatprep.subr.mxu0 0.0
    %284 = vmatpush1.msra.mxu0 0.0
    %285 = vmatprep.subr.mxu0 0.0
    %286 = vmatpush1.msra.mxu0 0.0
    %287 = vmatprep.subr.mxu0 0.0
    %288 = vmatpush1.msra.mxu0 0.0
    %289 = vmatprep.subr.mxu0 0.0
    %290 = vmatpush1.msra.mxu0 0.0
    %291 = vmatprep.subr.mxu0 0.0
    %292 = vmatpush1.msra.mxu0 0.0
    %293 = vmatprep.subr.mxu0 0.0
    %294 = vmatpush1.msra.mxu0 0.0
    %295 = vmatprep.subr.mxu0 0.0
    %296 = vmatpush1.msra.mxu0 0.0
    %297 = vmatprep.subr.mxu0 0.0
    %298 = vmatpush1.msra.mxu0 0.0
    %299 = vmatprep.subr.mxu0 0.0
    %300 = vmatpush1.msra.mxu0 0.0
    %301 = vmatprep.subr.mxu0 0.0
    %302 = vmatpush1.msra.mxu0 0.0
    %303 = vmatprep.subr.mxu0 0.0
    %304 = vmatpush1.msra.mxu0 0.0
    %305 = vmatprep.subr.mxu0 0.0
    %306 = vmatpush1.msra.mxu0 0.0
    %307 = vmatprep.subr.mxu0 0.0
    %308 = vmatpush1.msra.mxu0 0.0
    %309 = vmatprep.subr.mxu0 0.0
    %310 = vmatpush1.msra.mxu0 0.0
    %311 = vmatprep.subr.mxu0 0.0
    %312 = vmatpush1.msra.mxu0 0.0
    %313 = vmatprep.subr.mxu0 0.0
    %314 = vmatpush1.msra.mxu0 0.0
    %315 = vmatprep.subr.mxu0 0.0
    %316 = vmatpush1.msra.mxu0 0.0
    %317 = vmatprep.subr.mxu0 0.0
    %318 = vmatpush1.msra.mxu0 0.0
    %319 = vmatprep.subr.mxu0 0.0
    %320 = vmatpush1.msra.mxu0 0.0
    %321 = vmatprep.subr.mxu0 0.0
    %322 = vmatpush1.msra.mxu0 0.0
    %323 = vmatprep.subr.mxu0 0.0
    %324 = vmatpush1.msra.mxu0 0.0
    %325 = vmatprep.subr.mxu0 0.0
    %326 = vmatpush1.msra.mxu0 0.0
    %327 = vmatprep.subr.mxu0 0.0
    %328 = vmatpush1.msra.mxu0 0.0
    %329 = vmatprep.subr.mxu0 0.0
    %330 = vmatpush1.msra.mxu0 0.0
    %331 = vmatprep.subr.mxu0 0.0
    %332 = vmatpush1.msra.mxu0 0.0
    %333 = vmatprep.subr.mxu0 0.0
    %334 = vmatpush1.msra.mxu0 0.0
    %335 = vmatprep.subr.mxu0 0.0
    %336 = vmatpush1.msra.mxu0 0.0
    %337 = vmatprep.subr.mxu0 0.0
    %338 = vmatpush1.msra.mxu0 0.0
    %339 = vmatprep.subr.mxu0 0.0
    %340 = vmatpush1.msra.mxu0 0.0
    %341 = vmatprep.mubr.f32.mxu0 0.0
    %v342 = vand.u32 %v39, 4294901760
    %v343 = vsub.f32 %v39, %v342
    %v344 = vand.u32 %v343, 4294901760
    %345 = vmatmul.mubr.f32.gmra.mrb[0].mxu0 %v344
    %v346 = vpop.f32.mrb[0].mxu0
    %v347 = vadd.f32 %v272, %v346
    %v348 = vpop.f32.mrb[0].mxu0
    %349 = vdwg.mxu0
    %350 = vmatprep.subr.mxu0 0.0
    %v351 = vand.u32 %v35, 4294901760
    %v352 = vsub.f32 %v35, %v351
    %v353 = vand.u32 %v352, 4294901760
    %354 = vmatpush1.msra.mxu0 %v353
    %355 = vmatprep.subr.mxu0 0.0
    %v356 = vand.u32 %v36, 4294901760
    %v357 = vsub.f32 %v36, %v356
    %v358 = vand.u32 %v357, 4294901760
    %359 = vmatpush1.msra.mxu0 %v358
    %360 = vmatprep.subr.mxu0 0.0
    %361 = vmatpush1.msra.mxu0 0.0
    %362 = vmatprep.subr.mxu0 0.0
    %363 = vmatpush1.msra.mxu0 0.0
    %364 = vmatprep.subr.mxu0 0.0
    %365 = vmatpush1.msra.mxu0 0.0
    %366 = vmatprep.subr.mxu0 0.0
    %367 = vmatpush1.msra.mxu0 0.0
    %368 = vmatprep.subr.mxu0 0.0
    %369 = vmatpush1.msra.mxu0 0.0
    %370 = vmatprep.subr.mxu0 0.0
    %371 = vmatpush1.msra.mxu0 0.0
    %372 = vmatprep.subr.mxu0 0.0
    %373 = vmatpush1.msra.mxu0 0.0
    %374 = vmatprep.subr.mxu0 0.0
    %375 = vmatpush1.msra.mxu0 0.0
    %376 = vmatprep.subr.mxu0 0.0
    %377 = vmatpush1.msra.mxu0 0.0
    %378 = vmatprep.subr.mxu0 0.0
    %379 = vmatpush1.msra.mxu0 0.0
    %380 = vmatprep.subr.mxu0 0.0
    %381 = vmatpush1.msra.mxu0 0.0
    %382 = vmatprep.subr.mxu0 0.0
    %383 = vmatpush1.msra.mxu0 0.0
    %384 = vmatprep.subr.mxu0 0.0
    %385 = vmatpush1.msra.mxu0 0.0
    %386 = vmatprep.subr.mxu0 0.0
    %387 = vmatpush1.msra.mxu0 0.0
    %388 = vmatprep.subr.mxu0 0.0
    %389 = vmatpush1.msra.mxu0 0.0
    %390 = vmatprep.subr.mxu0 0.0
    %391 = vmatpush1.msra.mxu0 0.0
    %392 = vmatprep.subr.mxu0 0.0
    %393 = vmatpush1.msra.mxu0 0.0
    %394 = vmatprep.subr.mxu0 0.0
    %395 = vmatpush1.msra.mxu0 0.0
    %396 = vmatprep.subr.mxu0 0.0
    %397 = vmatpush1.msra.mxu0 0.0
    %398 = vmatprep.subr.mxu0 0.0
    %399 = vmatpush1.msra.mxu0 0.0
    %400 = vmatprep.subr.mxu0 0.0
    %401 = vmatpush1.msra.mxu0 0.0
    %402 = vmatprep.subr.mxu0 0.0
    %403 = vmatpush1.msra.mxu0 0.0
    %404 = vmatprep.subr.mxu0 0.0
    %405 = vmatpush1.msra.mxu0 0.0
    %406 = vmatprep.subr.mxu0 0.0
    %407 = vmatpush1.msra.mxu0 0.0
    %408 = vmatprep.subr.mxu0 0.0
    %409 = vmatpush1.msra.mxu0 0.0
    %410 = vmatprep.subr.mxu0 0.0
    %411 = vmatpush1.msra.mxu0 0.0
    %412 = vmatprep.subr.mxu0 0.0
    %413 = vmatpush1.msra.mxu0 0.0
    %414 = vmatprep.subr.mxu0 0.0
    %415 = vmatpush1.msra.mxu0 0.0
    %416 = vmatprep.subr.mxu0 0.0
    %417 = vmatpush1.msra.mxu0 0.0
    %418 = vmatprep.subr.mxu0 0.0
    %419 = vmatpush1.msra.mxu0 0.0
    %420 = vmatprep.mubr.f32.mxu0 0.0
    %v421 = vand.u32 %v39, 4294901760
    %422 = vmatmul.mubr.f32.gmra.mrb[0].mxu0 %v421
    %v423 = vpop.f32.mrb[0].mxu0
    %v424 = vadd.f32 %v347, %v423
    %v425 = vpop.f32.mrb[0].mxu0
    %426 = vdwg.mxu0
    %427 = vmatprep.subr.mxu0 0.0
    %v428 = vand.u32 %v35, 4294901760
    %429 = vmatpush1.msra.mxu0 %v428
    %430 = vmatprep.subr.mxu0 0.0
    %v431 = vand.u32 %v36, 4294901760
    %432 = vmatpush1.msra.mxu0 %v431
    %433 = vmatprep.subr.mxu0 0.0
    %434 = vmatpush1.msra.mxu0 0.0
    %435 = vmatprep.subr.mxu0 0.0
    %436 = vmatpush1.msra.mxu0 0.0
    %437 = vmatprep.subr.mxu0 0.0
    %438 = vmatpush1.msra.mxu0 0.0
    %439 = vmatprep.subr.mxu0 0.0
    %440 = vmatpush1.msra.mxu0 0.0
    %441 = vmatprep.subr.mxu0 0.0
    %442 = vmatpush1.msra.mxu0 0.0
    %443 = vmatprep.subr.mxu0 0.0
    %444 = vmatpush1.msra.mxu0 0.0
    %445 = vmatprep.subr.mxu0 0.0
    %446 = vmatpush1.msra.mxu0 0.0
    %447 = vmatprep.subr.mxu0 0.0
    %448 = vmatpush1.msra.mxu0 0.0
    %449 = vmatprep.subr.mxu0 0.0
    %450 = vmatpush1.msra.mxu0 0.0
    %451 = vmatprep.subr.mxu0 0.0
    %452 = vmatpush1.msra.mxu0 0.0
    %453 = vmatprep.subr.mxu0 0.0
    %454 = vmatpush1.msra.mxu0 0.0
    %455 = vmatprep.subr.mxu0 0.0
    %456 = vmatpush1.msra.mxu0 0.0
    %457 = vmatprep.subr.mxu0 0.0
    %458 = vmatpush1.msra.mxu0 0.0
    %459 = vmatprep.subr.mxu0 0.0
    %460 = vmatpush1.msra.mxu0 0.0
    %461 = vmatprep.subr.mxu0 0.0
    %462 = vmatpush1.msra.mxu0 0.0
    %463 = vmatprep.subr.mxu0 0.0
    %464 = vmatpush1.msra.mxu0 0.0
    %465 = vmatprep.subr.mxu0 0.0
    %466 = vmatpush1.msra.mxu0 0.0
    %467 = vmatprep.subr.mxu0 0.0
    %468 = vmatpush1.msra.mxu0 0.0
    %469 = vmatprep.subr.mxu0 0.0
    %470 = vmatpush1.msra.mxu0 0.0
    %471 = vmatprep.subr.mxu0 0.0
    %472 = vmatpush1.msra.mxu0 0.0
    %473 = vmatprep.subr.mxu0 0.0
    %474 = vmatpush1.msra.mxu0 0.0
    %475 = vmatprep.subr.mxu0 0.0
    %476 = vmatpush1.msra.mxu0 0.0
    %477 = vmatprep.subr.mxu0 0.0
    %478 = vmatpush1.msra.mxu0 0.0
    %479 = vmatprep.subr.mxu0 0.0
    %480 = vmatpush1.msra.mxu0 0.0
    %481 = vmatprep.subr.mxu0 0.0
    %482 = vmatpush1.msra.mxu0 0.0
    %483 = vmatprep.subr.mxu0 0.0
    %484 = vmatpush1.msra.mxu0 0.0
    %485 = vmatprep.subr.mxu0 0.0
    %486 = vmatpush1.msra.mxu0 0.0
    %487 = vmatprep.subr.mxu0 0.0
    %488 = vmatpush1.msra.mxu0 0.0
    %489 = vmatprep.subr.mxu0 0.0
    %490 = vmatpush1.msra.mxu0 0.0
    %491 = vmatprep.subr.mxu0 0.0
    %492 = vmatpush1.msra.mxu0 0.0
    %493 = vmatprep.mubr.f32.mxu0 0.0
    %v494 = vand.u32 %v39, 4294901760
    %495 = vmatmul.mubr.f32.gmra.mrb[0].mxu0 %v494
    %v496 = vpop.f32.mrb[0].mxu0
    %v497 = vadd.f32 %v424, %v496
    %v498 = vpop.f32.mrb[0].mxu0
    %499 = vdwg.mxu0
    %500 = vst [vmem:[#allocation5] sm:$0xff] %v497
    // Predicated region
    $region14: #{tpu_custom_call.1} parent=1 // pred_check
      _
    $region15: #{tpu_custom_call.1} parent=1 // pred_check_branch
      %502 = sbr.rel (0) target = $region17
    $region16: #{tpu_custom_call.1} parent=1 // pred_region
      %s504 = ssub.s32 128, 128
      %505 = vsyncadd [#allocation4], %s504
      %s507 = sshll.u32 [#allocation5], 4
      %s508 = int_to_ptr.vmem [resolvable:$true] %s507
      %510 = dma.vmem_to_hbm [thread:$0]  %s508, 128, %s2, [#allocation4]
    $region17: #{tpu_custom_call.1} parent=1 // pred_fallthru
      _
    // Predicated region
    $region18: #{tpu_custom_call.1} parent=1 // pred_check
      _
    $region19: #{tpu_custom_call.1} parent=1 // pred_check_branch
      %512 = sbr.rel (0) target = $region21
    $region20: #{tpu_custom_call.1} parent=1 // pred_region
      %513 = dma.done [#allocation4], 128
    $region21: #{tpu_custom_call.1} parent=1 // pred_fallthru
      _
    %514 = vsyncpa [#allocation3], 1
    %515 = vsyncpa [#allocation4], 1

</llo_original>
